<compile_context>
chip_gen: v6e
topology: v6e:2x2x1
jax: 0.10.0
libtpu: 0.0.40
codegen_flags: <defaults>
</compile_context>

<pallas_src>
import functools

import jax
import jax.numpy as jnp
from jax.experimental import pallas as pl
from jax.experimental.pallas import tpu as pltpu


def _gat_kernel(x_ref, adj_ref, wext_ref, wa2_ref, o_ref, *, alpha):
    bt, n, f_in = x_ref.shape
    f_out = o_ref.shape[-1]

    x = x_ref[...]                                    # (bt, N, F_in) f32
    x2d = x.reshape(bt * n, f_in)

    # One MXU pass gives [Wh | s1]  (s1 == Wh @ a1 folded into the projection).
    xw = jnp.dot(x2d, wext_ref[...],
                 preferred_element_type=jnp.float32)  # (bt*N, F_out+1)
    Wh = xw[:, :f_out].reshape(bt, n, f_out)          # (bt, N, F_out)
    s1 = xw[:, f_out:].reshape(bt, n, 1)              # (bt, N, 1) column layout

    # "Target" score directly in row (lane) layout: VPU multiply + lane reduce.
    # No (N,1)->(1,N) vreg transpose, no 1-wide MXU push.
    wa2 = wa2_ref[...]                                # (1, F_in)
    s2 = jnp.sum(x * wa2, axis=-1)                    # (bt, N), N on lanes
    s2 = s2[:, None, :]                               # (bt, 1, N)

    e = s1 + s2                                       # (bt, N, N)
    e = jnp.where(e > 0, e, alpha * e)                # LeakyReLU

    # Mask non-edges (adj is bf16; only its sign/positivity matters).
    att = jnp.where(adj_ref[...] > 0, e, jnp.float32(-9e15))

    # softmax over PyTorch dim=1  ==  axis 1 of the (bt, N, N) block.
    m = jnp.max(att, axis=1, keepdims=True)           # (bt, 1, N)
    p = jnp.exp(att - m)
    denom = jnp.sum(p, axis=1, keepdims=True)         # >= 1 (self-loops)
    attn = p * pl.reciprocal(denom, approx=True)      # EUP slot

    # Aggregate neighbor features (batched MXU matmul).
    h = jnp.einsum("bij,bjo->bio", attn, Wh,
                   preferred_element_type=jnp.float32)

    # ELU (concat=True). Dropout is identity in eval mode.
    out = jnp.where(h > 0, h, jnp.exp(h) - 1.0)
    o_ref[...] = out.astype(o_ref.dtype)


def _choose_batch_tile(B, max_tile):
    # Pack several batch elements per grid step (amortize per-step overhead),
    # but keep >= 2 grid steps when possible so both v7x TensorCores get work.
    divisors = [d for d in range(1, min(B, max_tile) + 1) if B % d == 0]
    two_step = [d for d in divisors if B // d >= 2]
    return max(two_step) if two_step else max(divisors)


def gat_forward(x, adj, W, a, *, alpha=0.2, batch_block=8):
    """x: (B, N, F_in), adj: (B, N, N), W: (F_in, F_out), a: (2*F_out, 1)."""
    B, N, F_in = x.shape
    F_out = W.shape[1]
    a1 = a[:F_out, :]                                  # (F_out, 1)
    a2 = a[F_out:, :]                                  # (F_out, 1)

    # Fold attention vectors into the projection (done once, outside the grid).
    w_ext = jnp.concatenate([W, W @ a1], axis=1)       # (F_in, F_out + 1)
    wa2_row = (W @ a2).reshape(1, F_in)                # (1, F_in) row layout

    # adj only feeds a `> 0` comparison -> bf16 halves its HBM traffic.
    adj_bf16 = adj.astype(jnp.bfloat16)

    bt = _choose_batch_tile(B, batch_block)
    grid = (B // bt,)

    # Explicit VMEM budget: double-buffered blocks + params, capped below
    # v7x's 64 MiB physical VMEM, floor at the 32 MiB default.
    block_bytes = (
        2 * bt * N * F_in * 4          # x (double buffered)
        + 2 * bt * N * N * 2           # adj bf16 (double buffered)
        + 2 * bt * N * F_out * 4       # out (double buffered)
        + (F_in * (F_out + 1) + F_in) * 4 * 2)
    vmem_limit = int(min(64 * 2 ** 20, max(32 * 2 ** 20, 4 * block_bytes)))

    kernel = functools.partial(_gat_kernel, alpha=alpha)
    return pl.pallas_call(
        kernel,
        out_shape=jax.ShapeDtypeStruct((B, N, F_out), x.dtype),
        grid_spec=pltpu.PrefetchScalarGridSpec(
            num_scalar_prefetch=0,
            grid=grid,
            in_specs=[
                pl.BlockSpec((bt, N, F_in), lambda b: (b, 0, 0)),
                pl.BlockSpec((bt, N, N), lambda b: (b, 0, 0)),
                pl.BlockSpec((F_in, F_out + 1), lambda b: (0, 0)),
                pl.BlockSpec((1, F_in), lambda b: (0, 0)),
            ],
            out_specs=pl.BlockSpec((bt, N, F_out), lambda b: (b, 0, 0)),
        ),
        compiler_params=pltpu.CompilerParams(
            dimension_semantics=("parallel",),
            vmem_limit_bytes=vmem_limit),
    )(x, adj_bf16, w_ext, wa2_row)


def _xavier_uniform(key, shape, gain):
    fan_in, fan_out = shape[0], shape[1]
    bound = gain * jnp.sqrt(6.0 / (fan_in + fan_out))
    return jax.random.uniform(key, shape, jnp.float32, -bound, bound)


def _reference(x, adj, W, a, alpha):
    F_out = W.shape[1]
    Wh = jnp.einsum("bnf,fo->bno", x, W)
    Wh1 = jnp.einsum("bno,ok->bnk", Wh, a[:F_out])
    Wh2 = jnp.einsum("bno,ok->bnk", Wh, a[F_out:])
    e = Wh1 + jnp.transpose(Wh2, (0, 2, 1))
    e = jnp.where(e > 0, e, alpha * e)
    att = jnp.where(adj > 0, e, -9e15)
    att = jax.nn.softmax(att, axis=1)
    h = jnp.einsum("bnm,bmo->bno", att, Wh)
    return jnp.where(h > 0, h, jnp.exp(h) - 1.0)


if __name__ == "__main__":
    B, N, F_in, F_out = 2, 16, 8, 16
    alpha = 0.2

    key = jax.random.PRNGKey(0)
    kx, kadj, kw, ka = jax.random.split(key, 4)

    x = jax.random.normal(kx, (B, N, F_in), dtype=jnp.float32)
    # Random sparse adjacency with self-loops.
    adj = (jax.random.uniform(kadj, (B, N, N)) > 0.6).astype(jnp.float32)
    adj = jnp.maximum(adj, jnp.eye(N, dtype=jnp.float32)[None])

    W = _xavier_uniform(kw, (F_in, F_out), gain=1.414)
    a = _xavier_uniform(ka, (2 * F_out, 1), gain=1.414)

    out = gat_forward(x, adj, W, a, alpha=alpha)
    out = jax.block_until_ready(out)

    ref = _reference(x, adj, W, a, alpha)
    assert out.shape == (B, N, F_out)
    # Tolerance loosened slightly: approx reciprocal (EUP) + re-associated
    # (x @ (W @ a1)) vs ((x @ W) @ a1) differ from the pure-f32 reference.
    assert jnp.allclose(out, ref, atol=1e-2, rtol=1e-2), "mismatch vs reference"

    print("KERNEL_OK")
</pallas_src>

<mosaic_0001>
module attributes {stable_mosaic.version = 11 : i64} {
  func.func @_gat_kernel(%arg0: i32, %arg1: memref<1x16x8xf32, #tpu.memory_space<vmem>>, %arg2: memref<1x16x16xbf16, #tpu.memory_space<vmem>>, %arg3: memref<8x17xf32, #tpu.memory_space<vmem>>, %arg4: memref<1x8xf32, #tpu.memory_space<vmem>>, %arg5: memref<1x16x16xf32, #tpu.memory_space<vmem>>) attributes {dimension_semantics = [#tpu.dimension_semantics<parallel>], iteration_bounds = array<i64: 2>, scalar_prefetch = 0 : i64, scratch_operands = 0 : i64, tpu.core_type = #tpu.core_type<tc>, window_params = [{transform_indices = @transform_0, window_bounds = array<i64: 1, 16, 8>}, {transform_indices = @transform_1, window_bounds = array<i64: 1, 16, 16>}, {pipeline_mode = #tpu.pipeline_mode<synchronous>, transform_indices = @transform_2, window_bounds = array<i64: 8, 17>}, {pipeline_mode = #tpu.pipeline_mode<synchronous>, transform_indices = @transform_3, window_bounds = array<i64: 1, 8>}, {transform_indices = @transform_4, window_bounds = array<i64: 1, 16, 16>}]} {
    %c0 = arith.constant 0 : index
    %c0_0 = arith.constant 0 : index
    %c0_1 = arith.constant 0 : index
    %0 = vector.load %arg1[%c0, %c0_0, %c0_1] : memref<1x16x8xf32, #tpu.memory_space<vmem>>, vector<1x16x8xf32>
    %1 = vector.shape_cast %0 : vector<1x16x8xf32> to vector<16x8xf32>
    %c0_2 = arith.constant 0 : index
    %c0_3 = arith.constant 0 : index
    %2 = vector.load %arg3[%c0_2, %c0_3] : memref<8x17xf32, #tpu.memory_space<vmem>>, vector<8x17xf32>
    %cst = arith.constant dense<0.000000e+00> : vector<16x17xf32>
    %3 = tpu.matmul %1, %2, %cst {dimension_numbers = #tpu.dot_dimension_numbers<[1], [0], [0], [1], [0, 0, 1, 1], [], []>} : vector<16x8xf32>, vector<8x17xf32>, vector<16x17xf32> -> vector<16x17xf32>
    %4 = vector.extract_strided_slice %3 {offsets = [0, 0], sizes = [16, 16], strides = [1, 1]} : vector<16x17xf32> to vector<16x16xf32>
    %5 = vector.shape_cast %4 : vector<16x16xf32> to vector<1x16x16xf32>
    %6 = vector.extract_strided_slice %3 {offsets = [0, 16], sizes = [16, 1], strides = [1, 1]} : vector<16x17xf32> to vector<16x1xf32>
    %7 = vector.shape_cast %6 : vector<16x1xf32> to vector<1x16x1xf32>
    %c0_4 = arith.constant 0 : index
    %c0_5 = arith.constant 0 : index
    %8 = vector.load %arg4[%c0_4, %c0_5] : memref<1x8xf32, #tpu.memory_space<vmem>>, vector<1x8xf32>
    %9 = vector.shape_cast %8 : vector<1x8xf32> to vector<1x1x8xf32>
    %10 = vector.broadcast %9 : vector<1x1x8xf32> to vector<1x16x8xf32>
    %11 = arith.mulf %0, %10 : vector<1x16x8xf32>
    %cst_6 = arith.constant dense<0.000000e+00> : vector<1x16xf32>
    %12 = vector.multi_reduction <add>, %11, %cst_6 [2] : vector<1x16x8xf32> to vector<1x16xf32>
    %13 = vector.shape_cast %12 : vector<1x16xf32> to vector<1x1x16xf32>
    %14 = vector.broadcast %7 : vector<1x16x1xf32> to vector<1x16x16xf32>
    %15 = vector.broadcast %13 : vector<1x1x16xf32> to vector<1x16x16xf32>
    %16 = arith.addf %14, %15 : vector<1x16x16xf32>
    %cst_7 = arith.constant 0.000000e+00 : f32
    %17 = vector.broadcast %cst_7 : f32 to vector<1x16x16xf32>
    %18 = arith.cmpf ogt, %16, %17 : vector<1x16x16xf32>
    %cst_8 = arith.constant 2.000000e-01 : f32
    %19 = vector.broadcast %cst_8 : f32 to vector<1x16x16xf32>
    %20 = arith.mulf %19, %16 : vector<1x16x16xf32>
    %21 = arith.select %18, %16, %20 : vector<1x16x16xi1>, vector<1x16x16xf32>
    %c0_9 = arith.constant 0 : index
    %c0_10 = arith.constant 0 : index
    %c0_11 = arith.constant 0 : index
    %22 = vector.load %arg2[%c0_9, %c0_10, %c0_11] : memref<1x16x16xbf16, #tpu.memory_space<vmem>>, vector<1x16x16xbf16>
    %cst_12 = arith.constant 0.000000e+00 : bf16
    %23 = vector.broadcast %cst_12 : bf16 to vector<1x16x16xbf16>
    %24 = arith.cmpf ogt, %22, %23 : vector<1x16x16xbf16>
    %cst_13 = arith.constant -9.000000e+15 : f32
    %25 = vector.broadcast %cst_13 : f32 to vector<1x16x16xf32>
    %26 = arith.select %24, %21, %25 : vector<1x16x16xi1>, vector<1x16x16xf32>
    %cst_14 = arith.constant dense<0xFF800000> : vector<1x16xf32>
    %27 = vector.multi_reduction <maximumf>, %26, %cst_14 [1] : vector<1x16x16xf32> to vector<1x16xf32>
    %28 = vector.shape_cast %27 : vector<1x16xf32> to vector<1x1x16xf32>
    %29 = vector.broadcast %28 : vector<1x1x16xf32> to vector<1x16x16xf32>
    %30 = arith.subf %26, %29 : vector<1x16x16xf32>
    %31 = math.exp %30 : vector<1x16x16xf32>
    %cst_15 = arith.constant dense<0.000000e+00> : vector<1x16xf32>
    %32 = vector.multi_reduction <add>, %31, %cst_15 [1] : vector<1x16x16xf32> to vector<1x16xf32>
    %33 = vector.shape_cast %32 : vector<1x16xf32> to vector<1x1x16xf32>
    %34 = tpu.reciprocal %33 {approx = true} : vector<1x1x16xf32> -> vector<1x1x16xf32>
    %35 = vector.broadcast %34 : vector<1x1x16xf32> to vector<1x16x16xf32>
    %36 = arith.mulf %31, %35 : vector<1x16x16xf32>
    "tpu.trace_start"() <{level = 10 : i32, message = "bij,bjo->bio"}> : () -> ()
    %cst_16 = arith.constant dense<0.000000e+00> : vector<1x16x16xf32>
    %37 = tpu.matmul %36, %5, %cst_16 {dimension_numbers = #tpu.dot_dimension_numbers<[2], [1], [1], [2], [0, 0, 0, 1, 1, 2], [0], [0]>} : vector<1x16x16xf32>, vector<1x16x16xf32>, vector<1x16x16xf32> -> vector<1x16x16xf32>
    %cst_17 = arith.constant 0.000000e+00 : f32
    "tpu.trace_stop"() : () -> ()
    %38 = vector.broadcast %cst_17 : f32 to vector<1x16x16xf32>
    %39 = arith.cmpf ogt, %37, %38 : vector<1x16x16xf32>
    %40 = math.exp %37 : vector<1x16x16xf32>
    %cst_18 = arith.constant 1.000000e+00 : f32
    %41 = vector.broadcast %cst_18 : f32 to vector<1x16x16xf32>
    %42 = arith.subf %40, %41 : vector<1x16x16xf32>
    %43 = arith.select %39, %37, %42 : vector<1x16x16xi1>, vector<1x16x16xf32>
    %c0_19 = arith.constant 0 : index
    %c0_20 = arith.constant 0 : index
    %c0_21 = arith.constant 0 : index
    %44 = vector.load %arg5[%c0_19, %c0_20, %c0_21] : memref<1x16x16xf32, #tpu.memory_space<vmem>>, vector<1x16x16xf32>
    tpu.vector_store %arg5[%c0_19, %c0_20, %c0_21], %43 {strides = array<i32>} : memref<1x16x16xf32, #tpu.memory_space<vmem>>, vector<1x16x16xf32>,
    return
  }
  func.func @transform_0(%arg0: i32) -> (i32, i32, i32) {
    %c0_i32 = arith.constant 0 : i32
    %c0_i32_0 = arith.constant 0 : i32
    %c0_i32_1 = arith.constant 0 : i32
    return %arg0, %c0_i32, %c0_i32_0 : i32, i32, i32
  }
  func.func @transform_1(%arg0: i32) -> (i32, i32, i32) {
    %c0_i32 = arith.constant 0 : i32
    %c0_i32_0 = arith.constant 0 : i32
    %c0_i32_1 = arith.constant 0 : i32
    return %arg0, %c0_i32, %c0_i32_0 : i32, i32, i32
  }
  func.func @transform_2(%arg0: i32) -> (i32, i32) {
    %c0_i32 = arith.constant 0 : i32
    %c0_i32_0 = arith.constant 0 : i32
    %c0_i32_1 = arith.constant 0 : i32
    return %c0_i32, %c0_i32_0 : i32, i32
  }
  func.func @transform_3(%arg0: i32) -> (i32, i32) {
    %c0_i32 = arith.constant 0 : i32
    %c0_i32_0 = arith.constant 0 : i32
    %c0_i32_1 = arith.constant 0 : i32
    return %c0_i32, %c0_i32_0 : i32, i32
  }
  func.func @transform_4(%arg0: i32) -> (i32, i32, i32) {
    %c0_i32 = arith.constant 0 : i32
    %c0_i32_0 = arith.constant 0 : i32
    %c0_i32_1 = arith.constant 0 : i32
    return %arg0, %c0_i32, %c0_i32_0 : i32, i32, i32
  }
}

</mosaic_0001>

<llo_original>
// kernel: tpu_custom_call.1
$region0: #{tpu_custom_call.1}
  #allocation0 [shape = 'u32[]', space=smem, size = 0x4, offset = 0x4, fixed_abs, tag = 'smem constant byte address 0x4 - core index']
  #allocation1 [shape = 'u32[144,128]{1,0:T(1,128)}', space=vmem, size = 0x12000, scoped, tag = 'internal scratch']
  %s0 = inlined_call_operand.vmem [shape: f32[2,16,8], index: 0, kind: input, shape index: {}]
  %s1 = inlined_call_operand.vmem [shape: bf16[2,16,16], index: 1, kind: input, shape index: {}]
  %s2 = inlined_call_operand.vmem [shape: f32[8,17], index: 2, kind: input, shape index: {}]
  %s3 = inlined_call_operand.vmem [shape: f32[1,8], index: 3, kind: input, shape index: {}]
  %s4 = inlined_call_operand.hbm [shape: f32[2,16,16], index: 4, kind: output, shape index: {}]
  %s5 = sld [smem:[#allocation0]]
  $region49: #{tpu_custom_call.1} parent=0
    _
  %s7 = ssub.s32 1, %s5
  %s8 = scalar_select 0, %s7, %s5
  $region1: #{tpu_custom_call.1} parent=0
    #allocation2 [shape = 'u8[16384]{0}', space=vmem, size = 0x4000, scoped, tag = 'output window, operand 0']
    #allocation3 [shape = 's32[2]{0}', space=sflag, size = 0x8, scoped, tag = 'scoped memory for tpu_custom_call.1']
    %9 = vsyncpa [#allocation3], 0
    %s10 = scalar_lea.sflag [#allocation3], 1
    %11 = vsyncpa %s10, 0
    loop: start=0, step=1, limit=4
    $region2: #{tpu_custom_call.1} parent=1 // loop_pre_header
      _
    $region3: #{tpu_custom_call.1} parent=1 // loop_header
      %s13 = sphi 0, %s17
      %p14 = scmp.ge.s32.totalorder %s13, 4
      %s23 = sphi 0, %s25
      %s26 = sphi 0, %s23
      %s27 = sphi 0, %s26
      %s43 = sphi 0, %s27
      %s49 = sphi 0, %s51
      %s52 = sphi 0, %s49
      %s53 = sphi 0, %s52
      %s69 = sphi 0, %s53
      %s73 = sphi 0, %s73
      %s75 = sphi 0, %s73
      %s76 = sphi 0, %s75
      %s90 = sphi 0, %s76
      %s94 = sphi 0, %s94
      %s96 = sphi 0, %s94
      %s97 = sphi 0, %s96
      %s111 = sphi 0, %s97
      %s117 = sphi 0, %s119
      %s120 = sphi 0, %s117
      %s121 = sphi 0, %s120
      %s137 = sphi 0, %s121
    $region4: #{tpu_custom_call.1} parent=1 // loop_header_branch
      %16 = sbr.rel (%p14) target = $region8
    $region5: #{tpu_custom_call.1} parent=1 // loop_body
      %s18 = ssub.s32 %s13, 1
      %s19 = ssub.s32 %s13, 2
      %s20 = sadd.s32 %s13, 1
      %s21 = ssub.s32 %s13, %s20
      %p22 = scmp.eq.s32.totalorder %s21, 0
      %s24 = sadd.s32 %s23, 1
      %s25 = scalar_select %p22, %s23, %s24
      %p28 = pneg %p22
      %p29 = scmp.eq.s32.totalorder %s13, 1
      %p30 = por %p28, %p29
      %p31 = scmp.ne.s32.totalorder %s23, %s26
      %p32 = scmp.eq.s32.totalorder %s13, 0
      %p33 = por %p31, %p32
      %p34 = scmp.ne.s32.totalorder %s23, %s26
      %p35 = scmp.eq.s32.totalorder %s18, 1
      %p36 = por %p34, %p35
      %p37 = scmp.ne.s32.totalorder %s26, %s27
      %p38 = scmp.eq.s32.totalorder %s18, 0
      %p39 = por %p37, %p38
      %p40 = scmp.ne.s32.totalorder %s26, %s27
      %p41 = scmp.eq.s32.totalorder %s19, 1
      %p42 = por %p40, %p41
      %p44 = scmp.ne.s32.totalorder %s27, %s43
      %p45 = scmp.eq.s32.totalorder %s19, 0
      %p46 = por %p44, %p45
      %s47 = ssub.s32 %s13, %s20
      %p48 = scmp.eq.s32.totalorder %s47, 0
      %s50 = sadd.s32 %s49, 1
      %s51 = scalar_select %p48, %s49, %s50
      %p54 = pneg %p48
      %p55 = scmp.eq.s32.totalorder %s13, 1
      %p56 = por %p54, %p55
      %p57 = scmp.ne.s32.totalorder %s49, %s52
      %p58 = scmp.eq.s32.totalorder %s13, 0
      %p59 = por %p57, %p58
      %p60 = scmp.ne.s32.totalorder %s49, %s52
      %p61 = scmp.eq.s32.totalorder %s18, 1
      %p62 = por %p60, %p61
      %p63 = scmp.ne.s32.totalorder %s52, %s53
      %p64 = scmp.eq.s32.totalorder %s18, 0
      %p65 = por %p63, %p64
      %p66 = scmp.ne.s32.totalorder %s52, %s53
      %p67 = scmp.eq.s32.totalorder %s19, 1
      %p68 = por %p66, %p67
      %p70 = scmp.ne.s32.totalorder %s53, %s69
      %p71 = scmp.eq.s32.totalorder %s19, 0
      %p72 = por %p70, %p71
      %s74 = sadd.s32 %s73, 1
      %p77 = scmp.eq.s32.totalorder %s13, 1
      %p78 = scmp.ne.s32.totalorder %s73, %s75
      %p79 = scmp.eq.s32.totalorder %s13, 0
      %p80 = por %p78, %p79
      %p81 = scmp.ne.s32.totalorder %s73, %s75
      %p82 = scmp.eq.s32.totalorder %s18, 1
      %p83 = por %p81, %p82
      %p84 = scmp.ne.s32.totalorder %s75, %s76
      %p85 = scmp.eq.s32.totalorder %s18, 0
      %p86 = por %p84, %p85
      %p87 = scmp.ne.s32.totalorder %s75, %s76
      %p88 = scmp.eq.s32.totalorder %s19, 1
      %p89 = por %p87, %p88
      %p91 = scmp.ne.s32.totalorder %s76, %s90
      %p92 = scmp.eq.s32.totalorder %s19, 0
      %p93 = por %p91, %p92
      %s95 = sadd.s32 %s94, 1
      %p98 = scmp.eq.s32.totalorder %s13, 1
      %p99 = scmp.ne.s32.totalorder %s94, %s96
      %p100 = scmp.eq.s32.totalorder %s13, 0
      %p101 = por %p99, %p100
      %p102 = scmp.ne.s32.totalorder %s94, %s96
      %p103 = scmp.eq.s32.totalorder %s18, 1
      %p104 = por %p102, %p103
      %p105 = scmp.ne.s32.totalorder %s96, %s97
      %p106 = scmp.eq.s32.totalorder %s18, 0
      %p107 = por %p105, %p106
      %p108 = scmp.ne.s32.totalorder %s96, %s97
      %p109 = scmp.eq.s32.totalorder %s19, 1
      %p110 = por %p108, %p109
      %p112 = scmp.ne.s32.totalorder %s97, %s111
      %p113 = scmp.eq.s32.totalorder %s19, 0
      %p114 = por %p112, %p113
      %s115 = ssub.s32 %s13, %s20
      %p116 = scmp.eq.s32.totalorder %s115, 0
      %s118 = sadd.s32 %s117, 1
      %s119 = scalar_select %p116, %s117, %s118
      %p122 = pneg %p116
      %p123 = scmp.eq.s32.totalorder %s13, 1
      %p124 = por %p122, %p123
      %p125 = scmp.ne.s32.totalorder %s117, %s120
      %p126 = scmp.eq.s32.totalorder %s13, 0
      %p127 = por %p125, %p126
      %p128 = scmp.ne.s32.totalorder %s117, %s120
      %p129 = scmp.eq.s32.totalorder %s18, 1
      %p130 = por %p128, %p129
      %p131 = scmp.ne.s32.totalorder %s120, %s121
      %p132 = scmp.eq.s32.totalorder %s18, 0
      %p133 = por %p131, %p132
      %p134 = scmp.ne.s32.totalorder %s120, %s121
      %p135 = scmp.eq.s32.totalorder %s19, 1
      %p136 = por %p134, %p135
      %p138 = scmp.ne.s32.totalorder %s121, %s137
      %p139 = scmp.eq.s32.totalorder %s19, 0
      %p140 = por %p138, %p139
      %p141 = scmp.le.s32.totalorder 1, %s13
      %p142 = scmp.lt.s32.totalorder %s13, 3
      %p143 = pnand %p141, %p142
      %p144 = pneg %p143
      // Predicated region
      $region9: #{tpu_custom_call.1} parent=5 // pred_check
        _
      $region10: #{tpu_custom_call.1} parent=5 // pred_check_branch
        %146 = sbr.rel (%p143) target = $region12
      $region11: #{tpu_custom_call.1} parent=5 // pred_region
        %s147 = ssub.s32 %s13, 1
        // Predicated region
        $region13: #{tpu_custom_call.1} parent=11 // pred_check
          %p148 = pneg %p86
        $region14: #{tpu_custom_call.1} parent=11 // pred_check_branch
          %150 = sbr.rel (%p148) target = $region16
        $region15: #{tpu_custom_call.1} parent=11 // pred_region
          _
        $region16: #{tpu_custom_call.1} parent=11 // pred_fallthru
          _
        // Predicated region
        $region17: #{tpu_custom_call.1} parent=11 // pred_check
          %p151 = pneg %p107
        $region18: #{tpu_custom_call.1} parent=11 // pred_check_branch
          %153 = sbr.rel (%p151) target = $region20
        $region19: #{tpu_custom_call.1} parent=11 // pred_region
          _
        $region20: #{tpu_custom_call.1} parent=11 // pred_fallthru
          _
      $region12: #{tpu_custom_call.1} parent=5 // pred_fallthru
        _
      %p154 = scmp.lt.s32.totalorder %s13, 2
      // Predicated region
      $region21: #{tpu_custom_call.1} parent=5 // pred_check
        %p155 = pneg %p154
      $region22: #{tpu_custom_call.1} parent=5 // pred_check_branch
        %157 = sbr.rel (%p155) target = $region24
      $region23: #{tpu_custom_call.1} parent=5 // pred_region
        // Predicated region
        $region25: #{tpu_custom_call.1} parent=23 // pred_check
          %p158 = pneg %p33
        $region26: #{tpu_custom_call.1} parent=23 // pred_check_branch
          %160 = sbr.rel (%p158) target = $region28
        $region27: #{tpu_custom_call.1} parent=23 // pred_region
          %p161 = scmp.lt.s32.totalorder %s13, 1
          %s162 = scalar_select %p161, %s13, 1
          %s163 = smul.addr %s162, 2
          %s164 = smul.addr %s163, 8
          %s165 = scalar_lea.vmem %s0, %s164
        $region28: #{tpu_custom_call.1} parent=23 // pred_fallthru
          _
        // Predicated region
        $region29: #{tpu_custom_call.1} parent=23 // pred_check
          %p166 = pneg %p59
        $region30: #{tpu_custom_call.1} parent=23 // pred_check_branch
          %168 = sbr.rel (%p166) target = $region32
        $region31: #{tpu_custom_call.1} parent=23 // pred_region
          %p169 = scmp.lt.s32.totalorder %s13, 1
          %s170 = scalar_select %p169, %s13, 1
          %s171 = smul.addr %s170, 2
          %s172 = smul.addr %s171, 4
          %s173 = scalar_lea.vmem %s1, %s172
        $region32: #{tpu_custom_call.1} parent=23 // pred_fallthru
          _
      $region24: #{tpu_custom_call.1} parent=5 // pred_fallthru
        _
      %p174 = scmp.le.s32.totalorder 1, %s13
      %p175 = scmp.lt.s32.totalorder %s13, 3
      %p176 = pnand %p174, %p175
      %p177 = pneg %p176
      // Predicated region
      $region33: #{tpu_custom_call.1} parent=5 // pred_check
        _
      $region34: #{tpu_custom_call.1} parent=5 // pred_check_branch
        %179 = sbr.rel (%p176) target = $region36
      $region35: #{tpu_custom_call.1} parent=5 // pred_region
        %s180 = ssub.s32 %s13, 1
        %p181 = scmp.lt.s32.totalorder %s18, 1
        %s182 = scalar_select %p181, %s18, 1
        %s183 = smul.addr %s182, 2
        %s184 = smul.addr %s183, 8
        %s185 = scalar_lea.vmem %s0, %s184
        %p186 = pneg %p39
        %p187 = pneg %p36
        %p188 = scmp.lt.s32.totalorder %s18, 1
        %s189 = scalar_select %p188, %s18, 1
        %s190 = smul.addr %s189, 2
        %s191 = smul.addr %s190, 4
        %s192 = scalar_lea.vmem %s1, %s191
        %p193 = pneg %p65
        %p194 = pneg %p62
        %p195 = pneg %p86
        %p196 = pneg %p83
        %p197 = pneg %p107
        %p198 = pneg %p104
        %p199 = pneg %p133
        %p200 = pneg %p130
        %s201 = sand.u32 %s120, 1
        %s202 = scalar_lea.sflag [#allocation3], %s201
        %s203 = sand.u32 %s120, 1
        %s204 = smul.addr %s203, 16
        %s205 = scalar_lea.vmem [#allocation2], %s204
        %p206 = scmp.lt.s32.totalorder %s18, 1
        %s207 = scalar_select %p206, %s18, 1
        %s208 = smul.addr %s207, 2
        %s209 = smul.addr %s208, 8
        %s210 = scalar_lea.vmem %s0, %s209
        %p211 = scmp.lt.s32.totalorder %s18, 1
        %s212 = scalar_select %p211, %s18, 1
        %s213 = smul.addr %s212, 2
        %s214 = smul.addr %s213, 4
        %s215 = scalar_lea.vmem %s1, %s214
        %v219 = vld [vmem:[%s210] sm:$0xff]
        %v220 = vld [vmem:[%s210 + $0x8] sm:$0xff]
        %v221 = vld [vmem:[%s2] sm:$0xff]
        %vm222 = vcmask 64512
        %v224 = vsel %vm222, %v219, 0
        %v227 = vsel %vm222, %v220, 0
        %229 = vmatprep.subr.mxu0 0.0
        %230 = vmatpush1.msra.mxu0 0.0
        %231 = vmatprep.subr.mxu0 0.0
        %232 = vmatpush1.msra.mxu0 0.0
        %233 = vmatprep.subr.mxu0 0.0
        %234 = vmatpush1.msra.mxu0 0.0
        %235 = vmatprep.subr.mxu0 0.0
        %236 = vmatpush1.msra.mxu0 0.0
        %237 = vmatprep.subr.mxu0 0.0
        %238 = vmatpush1.msra.mxu0 0.0
        %239 = vmatprep.subr.mxu0 0.0
        %240 = vmatpush1.msra.mxu0 0.0
        %241 = vmatprep.subr.mxu0 0.0
        %242 = vmatpush1.msra.mxu0 0.0
        %243 = vmatprep.subr.mxu0 0.0
        %244 = vmatpush1.msra.mxu0 0.0
        %245 = vmatprep.subr.mxu0 0.0
        %246 = vmatpush1.msra.mxu0 0.0
        %247 = vmatprep.subr.mxu0 0.0
        %248 = vmatpush1.msra.mxu0 0.0
        %249 = vmatprep.subr.mxu0 0.0
        %250 = vmatpush1.msra.mxu0 0.0
        %251 = vmatprep.subr.mxu0 0.0
        %252 = vmatpush1.msra.mxu0 0.0
        %253 = vmatprep.subr.mxu0 0.0
        %254 = vmatpush1.msra.mxu0 0.0
        %255 = vmatprep.subr.mxu0 0.0
        %256 = vmatpush1.msra.mxu0 0.0
        %257 = vmatprep.subr.mxu0 0.0
        %258 = vmatpush1.msra.mxu0 0.0
        %259 = vmatprep.subr.mxu0 0.0
        %260 = vmatpush1.msra.mxu0 %v221
        %261 = vmatprep.subr.mxu0 0.0
        %262 = vmatpush2.msra.mxu0 0.0
        %263 = vmatprep.subr.mxu0 0.0
        %264 = vmatpush2.msra.mxu0 0.0
        %265 = vmatprep.subr.mxu0 0.0
        %266 = vmatpush2.msra.mxu0 0.0
        %267 = vmatprep.subr.mxu0 0.0
        %268 = vmatpush2.msra.mxu0 0.0
        %269 = vmatprep.subr.mxu0 0.0
        %270 = vmatpush2.msra.mxu0 0.0
        %271 = vmatprep.subr.mxu0 0.0
        %272 = vmatpush2.msra.mxu0 0.0
        %273 = vmatprep.subr.mxu0 0.0
        %274 = vmatpush2.msra.mxu0 0.0
        %275 = vmatprep.subr.mxu0 0.0
        %276 = vmatpush2.msra.mxu0 0.0
        %277 = vmatprep.subr.mxu0 0.0
        %278 = vmatpush2.msra.mxu0 0.0
        %279 = vmatprep.subr.mxu0 0.0
        %280 = vmatpush2.msra.mxu0 0.0
        %281 = vmatprep.subr.mxu0 0.0
        %282 = vmatpush2.msra.mxu0 0.0
        %283 = vmatprep.subr.mxu0 0.0
        %284 = vmatpush2.msra.mxu0 0.0
        %285 = vmatprep.subr.mxu0 0.0
        %286 = vmatpush2.msra.mxu0 0.0
        %287 = vmatprep.subr.mxu0 0.0
        %288 = vmatpush2.msra.mxu0 0.0
        %289 = vmatprep.subr.mxu0 0.0
        %290 = vmatpush2.msra.mxu0 0.0
        %291 = vmatprep.subr.mxu0 0.0
        %292 = vmatpush2.msra.mxu0 0.0
        %293 = vmatprep.mubr.f32.mxu0 0.0
        %294 = vmatmul.mubr.f32.gmra.mxu0 %v224
        %v295 = vpop.f32.mrf.mxu0
        %v296 = vadd.f32 0.0, %v295
        %v297 = vpop.f32.mrf.mxu0
        %298 = vmatprep.mubr.f32.mxu0 0.0
        %299 = vmatmul.mubr.f32.gmra.mxu0 %v227
        %v300 = vpop.f32.mrf.mxu0
        %v301 = vadd.f32 0.0, %v300
        %v302 = vpop.f32.mrf.mxu0
        %303 = vdwg.mxu0
        %v304 = vld [vmem:[%s3] sm:$0x1]
        %v306 = vlaneseq
        %v307 = vshrl.u32 %v306, 7
        %v308 = vsub.s32 0, %v307
        %v309 = vrot.slane %v304, %v308
        %v311 = vmul.f32 %v219, %v309
        %v312 = vmul.f32 %v220, %v309
        %v313 = vsel %vm222, %v311, 0.0
        %314 = vadd.xlane.f32.xlu0 %v313
        %v315 = vpop.xlane.xlu0 %314
        %v316 = vsel %vm222, %v312, 0.0
        %317 = vadd.xlane.f32.xlu0 %v316
        %v318 = vpop.xlane.xlu0 %317
        %320 = vset.pattern.permute.xlu0 16
        %321 = vperm.xlu0 %320, %v296
        %v322 = vpop.permute.xlu0 %321
        %325 = vset.pattern.permute.xlu0 16
        %326 = vperm.xlu0 %325, %v301
        %v327 = vpop.permute.xlu0 %326
        %v331 = vlaneseq
        %v332 = vand.u32 %v331, 127
        %v333 = vlaneseq
        %v334 = vshrl.u32 %v333, 7
        %v335 = vsub.s32 %v332, %v334
        %v336 = vrot.slane %v315, %v335
        %v337 = vadd.s32 %v332, 4294967288
        %v338 = vlaneseq
        %v339 = vshrl.u32 %v338, 7
        %v340 = vsub.s32 %v337, %v339
        %v341 = vrot.slane %v318, %v340
        %vm342 = vcmask 130112
        %v343 = vsel %vm342, %v341, %v336
        %vm344 = vcmask 1042434
        %v345 = vsel %vm344, %v343, %v343
        %vm346 = vcmask 1043459
        %v347 = vsel %vm346, %v343, %v345
        %vm348 = vcmask 1044484
        %v349 = vsel %vm348, %v343, %v347
        %vm350 = vcmask 1045509
        %v351 = vsel %vm350, %v343, %v349
        %vm352 = vcmask 1046534
        %v353 = vsel %vm352, %v343, %v351
        %vm354 = vcmask 1047559
        %v355 = vsel %vm354, %v343, %v353
        %v357 = vadd.f32 %v322, %v355
        %v358 = vadd.f32 %v327, %v355
        %vm359 = vcmp.gt.f32.partialorder %v357, 0.0
        %vm360 = vcmp.gt.f32.partialorder %v358, 0.0
        %v361 = vmul.f32 %v357, 0.2
        %v362 = vmul.f32 %v358, 0.2
        %v363 = vsel %vm359, %v357, %v361
        %v364 = vsel %vm360, %v358, %v362
        %v365 = vld [vmem:[%s215] sm:$0xf]
        %v366 = vld [vmem:[%s215 + $0x4] sm:$0xf]
        %vm367 = vcmp.gt.bf16.partialorder %v365, 0
        %vm368 = vcmp.gt.bf16.partialorder %v366, 0
        %v369 = vsel %vm367, 65537, 0
        %v370 = vsel %vm368, 65537, 0
        %v371 = vunpack.c.l.b16 %v369
        %v372 = vunpack.c.l.b16 %v370
        %vm373 = vcmp.ne.s32.totalorder %v371, 0
        %vm374 = vcmp.ne.s32.totalorder %v372, 0
        %v375 = vsel %vm373, %v363, -9e+15
        %v376 = vsel %vm374, %v364, -9e+15
        %vm377 = vcmask 130048
        %v378 = vsel %vm377, %v375, -inf
        %v379 = vsel %vm377, %v376, -inf
        %v380 = vmax.f32 %v378, %v379
        %v381 = vrot.slane %v380, 4
        %v382 = vmax.f32 %v380, %v381
        %v383 = vrot.slane %v382, 2
        %v384 = vmax.f32 %v382, %v383
        %v385 = vrot.slane %v384, 1
        %v386 = vmax.f32 %v384, %v385
        %v387 = vsub.f32 %v375, %v386
        %v388 = vsub.f32 %v376, %v386
        %v389 = vmul.f32 %v387, 1.442695
        %v390 = vpow.pop %v389
        %v391 = vmul.f32 %v388, 1.442695
        %v392 = vpow.pop %v391
        %v393 = vsel %vm377, %v390, 0.0
        %v394 = vsel %vm377, %v392, 0.0
        %v395 = vadd.f32 %v393, %v394
        %v396 = vrot.slane %v395, 4
        %v397 = vadd.f32 %v395, %v396
        %v398 = vrot.slane %v397, 2
        %v399 = vadd.f32 %v397, %v398
        %v400 = vrot.slane %v399, 1
        %v401 = vadd.f32 %v399, %v400
        %v402 = vrcp.pop %v401
        %v403 = vmul.f32 %v390, %v402
        %v404 = vmul.f32 %v392, %v402
        %v406 = vsel %vm377, %v403, 0
        %v409 = vsel %vm377, %v404, 0
        %411 = vmatprep.subr.mxu0 0.0
        %412 = vmatpush1.msra.mxu0 0.0
        %413 = vmatprep.subr.mxu0 0.0
        %414 = vmatpush1.msra.mxu0 0.0
        %415 = vmatprep.subr.mxu0 0.0
        %416 = vmatpush1.msra.mxu0 0.0
        %417 = vmatprep.subr.mxu0 0.0
        %418 = vmatpush1.msra.mxu0 0.0
        %419 = vmatprep.subr.mxu0 0.0
        %420 = vmatpush1.msra.mxu0 0.0
        %421 = vmatprep.subr.mxu0 0.0
        %422 = vmatpush1.msra.mxu0 0.0
        %423 = vmatprep.subr.mxu0 0.0
        %424 = vmatpush1.msra.mxu0 0.0
        %425 = vmatprep.subr.mxu0 0.0
        %426 = vmatpush1.msra.mxu0 0.0
        %427 = vmatprep.subr.mxu0 0.0
        %428 = vmatpush1.msra.mxu0 0.0
        %429 = vmatprep.subr.mxu0 0.0
        %430 = vmatpush1.msra.mxu0 0.0
        %431 = vmatprep.subr.mxu0 0.0
        %432 = vmatpush1.msra.mxu0 0.0
        %433 = vmatprep.subr.mxu0 0.0
        %434 = vmatpush1.msra.mxu0 0.0
        %435 = vmatprep.subr.mxu0 0.0
        %436 = vmatpush1.msra.mxu0 0.0
        %437 = vmatprep.subr.mxu0 0.0
        %438 = vmatpush1.msra.mxu0 0.0
        %439 = vmatprep.subr.mxu0 0.0
        %440 = vmatpush1.msra.mxu0 %v301
        %441 = vmatprep.subr.mxu0 0.0
        %442 = vmatpush1.msra.mxu0 %v296
        %443 = vmatprep.subr.mxu0 0.0
        %444 = vmatpush2.msra.mxu0 0.0
        %445 = vmatprep.subr.mxu0 0.0
        %446 = vmatpush2.msra.mxu0 0.0
        %447 = vmatprep.subr.mxu0 0.0
        %448 = vmatpush2.msra.mxu0 0.0
        %449 = vmatprep.subr.mxu0 0.0
        %450 = vmatpush2.msra.mxu0 0.0
        %451 = vmatprep.subr.mxu0 0.0
        %452 = vmatpush2.msra.mxu0 0.0
        %453 = vmatprep.subr.mxu0 0.0
        %454 = vmatpush2.msra.mxu0 0.0
        %455 = vmatprep.subr.mxu0 0.0
        %456 = vmatpush2.msra.mxu0 0.0
        %457 = vmatprep.subr.mxu0 0.0
        %458 = vmatpush2.msra.mxu0 0.0
        %459 = vmatprep.subr.mxu0 0.0
        %460 = vmatpush2.msra.mxu0 0.0
        %461 = vmatprep.subr.mxu0 0.0
        %462 = vmatpush2.msra.mxu0 0.0
        %463 = vmatprep.subr.mxu0 0.0
        %464 = vmatpush2.msra.mxu0 0.0
        %465 = vmatprep.subr.mxu0 0.0
        %466 = vmatpush2.msra.mxu0 0.0
        %467 = vmatprep.subr.mxu0 0.0
        %468 = vmatpush2.msra.mxu0 0.0
        %469 = vmatprep.subr.mxu0 0.0
        %470 = vmatpush2.msra.mxu0 0.0
        %471 = vmatprep.subr.mxu0 0.0
        %472 = vmatpush2.msra.mxu0 0.0
        %473 = vmatprep.subr.mxu0 0.0
        %474 = vmatpush2.msra.mxu0 0.0
        %475 = vmatprep.mubr.f32.mxu0 0.0
        %476 = vmatmul.mubr.f32.gmra.mxu0 %v406
        %v477 = vpop.f32.mrf.mxu0
        %v478 = vadd.f32 0.0, %v477
        %v479 = vpop.f32.mrf.mxu0
        %480 = vmatprep.mubr.f32.mxu0 0.0
        %481 = vmatmul.mubr.f32.gmra.mxu0 %v409
        %v482 = vpop.f32.mrf.mxu0
        %v483 = vadd.f32 0.0, %v482
        %v484 = vpop.f32.mrf.mxu0
        %485 = vdwg.mxu0
        %vm486 = vcmp.gt.f32.partialorder %v478, 0.0
        %vm487 = vcmp.gt.f32.partialorder %v483, 0.0
        %v488 = vmul.f32 %v478, 1.442695
        %v489 = vpow.pop %v488
        %v490 = vmul.f32 %v483, 1.442695
        %v491 = vpow.pop %v490
        %v492 = vsub.f32 %v489, 1.0
        %v493 = vsub.f32 %v491, 1.0
        %v494 = vsel %vm486, %v478, %v492
        %v495 = vsel %vm487, %v483, %v493
        %496 = vst.msk [vmem:[%s205] sm:$0xff] %vm377, %v494
        %497 = vst.msk [vmem:[%s205 + $0x8] sm:$0xff] %vm377, %v495
        %s498 = sand.u32 %s120, 1
        %s499 = scalar_lea.sflag [#allocation3], %s498
        %s500 = sand.u32 %s120, 1
        %s501 = smul.addr %s500, 16
        %s502 = scalar_lea.vmem [#allocation2], %s501
        // Predicated region
        $region37: #{tpu_custom_call.1} parent=35 // pred_check
          %p503 = pneg %p130
        $region38: #{tpu_custom_call.1} parent=35 // pred_check_branch
          %505 = sbr.rel (%p503) target = $region40
        $region39: #{tpu_custom_call.1} parent=35 // pred_region
          %s507 = ssub.s32 256, 256
          %508 = vsyncadd %s499, %s507
          %s509 = smul.addr %s18, 2
          %s510 = smul.addr %s509, 128
          %s511 = scalar_lea.hbm %s4, %s510
          %s512 = sshll.u32 %s502, 4
          %s513 = int_to_ptr.vmem [resolvable:$true] %s512
          %518 = dma.vmem_to_hbm [thread:$0]  %s513, 256, %s511, %s499, 128, 128, 8
        $region40: #{tpu_custom_call.1} parent=35 // pred_fallthru
          _
      $region36: #{tpu_custom_call.1} parent=5 // pred_fallthru
        _
      %p519 = scmp.le.s32.totalorder 2, %s13
      // Predicated region
      $region41: #{tpu_custom_call.1} parent=5 // pred_check
        %p520 = pneg %p519
      $region42: #{tpu_custom_call.1} parent=5 // pred_check_branch
        %522 = sbr.rel (%p520) target = $region44
      $region43: #{tpu_custom_call.1} parent=5 // pred_region
        %s523 = ssub.s32 %s13, 2
        // Predicated region
        $region45: #{tpu_custom_call.1} parent=43 // pred_check
          %p524 = pneg %p136
        $region46: #{tpu_custom_call.1} parent=43 // pred_check_branch
          %526 = sbr.rel (%p524) target = $region48
        $region47: #{tpu_custom_call.1} parent=43 // pred_region
          %s527 = sand.u32 %s121, 1
          %s528 = scalar_lea.sflag [#allocation3], %s527
          %s529 = sand.u32 %s121, 1
          %s530 = smul.addr %s529, 16
          %s531 = scalar_lea.vmem [#allocation2], %s530
          %532 = dma.done %s528, 256
        $region48: #{tpu_custom_call.1} parent=43 // pred_fallthru
          _
      $region44: #{tpu_custom_call.1} parent=5 // pred_fallthru
        _
    $region6: #{tpu_custom_call.1} parent=1 // loop_footer
      %s17 = sadd.s32 1, %s13
    $region7: #{tpu_custom_call.1} parent=1 // loop_footer_branch
      %12 = sbr.rel target = $region3
    $region8: #{tpu_custom_call.1} parent=1 // loop_exit
      _
    %533 = vsyncpa [#allocation3], 1
    %s534 = scalar_lea.sflag [#allocation3], 1
    %535 = vsyncpa %s534, 1

</llo_original>
